<compile_context>
chip_gen: v5e
topology: v5e:2x2
jax: 0.10.0
libtpu: 0.0.40
codegen_flags: <defaults>
</compile_context>

<pallas_src>
import functools

import jax
import jax.numpy as jnp
from jax.experimental import pallas as pl
from jax.experimental.pallas import tpu as pltpu

_DEFAULT_TILE_B = 8192   # big tiles -> near HBM-roofline streaming of x / logits


def _round_up(n, m):
    return ((n + m - 1) // m) * m


def _mlp_kernel(x_ref, w1_ref, b1_ref, w2_ref, b2_ref, o_ref):
    # Hidden layer: (tb, F) @ (F, H) on the MXU, f32 accumulation, f32 bias add.
    h = jnp.dot(x_ref[...], w1_ref[...], preferred_element_type=jnp.float32)
    h = h + b1_ref[...]
    # Sigmoid: exp and approximate reciprocal both run on the EUP slot.
    # (Garbage rows of a partial last batch block may produce inf/NaN here; they
    #  are masked on store by Pallas, so they never reach the output.)
    e = jnp.exp(-h)
    h = pl.reciprocal(1.0 + e, approx=True)
    # Output layer: (tb, H) @ (H, C) on the MXU, f32 accumulation, f32 bias add.
    out = jnp.dot(h, w2_ref[...], preferred_element_type=jnp.float32)
    out = out + b2_ref[...]
    o_ref[...] = out.astype(o_ref.dtype)


@functools.partial(jax.jit, static_argnames=("tile_b",))
def nn_classifier_forward(x, w1, b1, w2, b2, *, tile_b=_DEFAULT_TILE_B):
    """Forward pass of NNClassifier (returns logits, no softmax).

    x : (B, n_feature)           float32 (or bf16 if already stored that way)
    w1: (n_feature, n_hidden)    (transposed vs torch Linear.weight)
    b1: (1, n_hidden)
    w2: (n_hidden, n_class)
    b2: (1, n_class)
    returns logits (B, n_class) float32
    """
    B, F = x.shape
    H = w1.shape[1]
    C = w2.shape[1]

    # Batch tile: multiple of 8 (so partial last blocks still satisfy the (8,128)
    # rule), capped so the grid has >=2 steps for medium batches (v7x megacore).
    if B <= 8:
        tb = B                       # single block; block dim == full array dim
    else:
        tb = min(tile_b, _round_up(pl.cdiv(B, 2), 8))
        tb = max(tb, 8)
    grid = (pl.cdiv(B, tb),)

    b1f = b1.astype(jnp.float32)
    b2f = b2.astype(jnp.float32)

    x_isize = jnp.dtype(x.dtype).itemsize
    w_isize = jnp.dtype(w1.dtype).itemsize
    cost = pl.CostEstimate(
        flops=2 * B * (F * H + H * C),
        transcendentals=B * H,
        bytes_accessed=(B * F * x_isize          # x stream
                        + F * H * w_isize        # w1 (resident, loaded once)
                        + H * C * w_isize        # w2 (resident, loaded once)
                        + (H + C) * 4            # biases
                        + B * C * 4),            # output stream (unpadded)
    )

    out = pl.pallas_call(
        _mlp_kernel,
        out_shape=jax.ShapeDtypeStruct((B, C), jnp.float32),
        grid_spec=pltpu.PrefetchScalarGridSpec(
            num_scalar_prefetch=0,
            grid=grid,
            in_specs=[
                pl.BlockSpec((tb, F), lambda i: (i, 0)),   # x: streamed / pipelined
                pl.BlockSpec((F, H), lambda i: (0, 0)),    # w1: VMEM-resident
                pl.BlockSpec((1, H), lambda i: (0, 0)),    # b1: VMEM-resident
                pl.BlockSpec((H, C), lambda i: (0, 0)),    # w2: VMEM-resident
                pl.BlockSpec((1, C), lambda i: (0, 0)),    # b2: VMEM-resident
            ],
            out_specs=pl.BlockSpec((tb, C), lambda i: (i, 0)),
        ),
        compiler_params=pltpu.CompilerParams(
            dimension_semantics=("parallel",),   # batch axis sharded across TCs on v7x
        ),
        cost_estimate=cost,
    )(x, w1, b1f, w2, b2f)

    return out


def init_params(key, n_feature, n_class, n_hidden=32):
    """Deterministic init mimicking nn.Linear default (uniform +-1/sqrt(fan_in))."""
    k1, k2, k3, k4 = jax.random.split(key, 4)
    bound1 = 1.0 / jnp.sqrt(jnp.float32(n_feature))
    bound2 = 1.0 / jnp.sqrt(jnp.float32(n_hidden))
    w1 = jax.random.uniform(k1, (n_feature, n_hidden), jnp.float32, -bound1, bound1)
    b1 = jax.random.uniform(k2, (1, n_hidden), jnp.float32, -bound1, bound1)
    w2 = jax.random.uniform(k3, (n_hidden, n_class), jnp.float32, -bound2, bound2)
    b2 = jax.random.uniform(k4, (1, n_class), jnp.float32, -bound2, bound2)
    return w1, b1, w2, b2


def _reference(x, w1, b1, w2, b2):
    return jax.nn.sigmoid(x @ w1 + b1) @ w2 + b2


if __name__ == "__main__":
    key = jax.random.PRNGKey(0)
    n_feature, n_class = 16, 4
    kx, kx2, kp = jax.random.split(key, 3)
    w1, b1, w2, b2 = init_params(kp, n_feature, n_class)

    # 1) Small batch (single grid step).
    x_small = jax.random.normal(kx, (8, n_feature), jnp.float32)
    logits = nn_classifier_forward(x_small, w1, b1, w2, b2)
    jax.block_until_ready(logits)
    ref = _reference(x_small, w1, b1, w2, b2)
    assert logits.shape == (8, n_class)
    assert jnp.allclose(logits, ref, atol=2e-2, rtol=2e-2), "small-batch mismatch"

    # 2) Ragged batch exercising the batch grid (3 tiles of 128 rows, last partial).
    x_big = jax.random.normal(kx2, (300, n_feature), jnp.float32)
    logits_big = nn_classifier_forward(x_big, w1, b1, w2, b2, tile_b=128)
    jax.block_until_ready(logits_big)
    ref_big = _reference(x_big, w1, b1, w2, b2)
    assert logits_big.shape == (300, n_class)
    assert jnp.allclose(logits_big, ref_big, atol=2e-2, rtol=2e-2), "grid mismatch"
    assert jnp.all(jnp.isfinite(logits_big)), "non-finite logits"

    # 3) Default (large) tile path: grid auto-capped to >=2 steps.
    logits_def = nn_classifier_forward(x_big, w1, b1, w2, b2)
    jax.block_until_ready(logits_def)
    assert jnp.allclose(logits_def, ref_big, atol=2e-2, rtol=2e-2), "default-tile mismatch"

    # TODO(synk): partial_fit / fit / Adam / CrossEntropyLoss / predict_proba softmax are
    # training/optimizer-side logic, not part of forward(); not implemented as kernels.
    print("KERNEL_OK")
</pallas_src>

<mosaic_0001>
module attributes {stable_mosaic.version = 11 : i64} {
  func.func @_mlp_kernel(%arg0: i32, %arg1: memref<8x16xf32, #tpu.memory_space<vmem>>, %arg2: memref<16x32xf32, #tpu.memory_space<vmem>>, %arg3: memref<1x32xf32, #tpu.memory_space<vmem>>, %arg4: memref<32x4xf32, #tpu.memory_space<vmem>>, %arg5: memref<1x4xf32, #tpu.memory_space<vmem>>, %arg6: memref<8x4xf32, #tpu.memory_space<vmem>>) attributes {dimension_semantics = [#tpu.dimension_semantics<parallel>], iteration_bounds = array<i64: 1>, scalar_prefetch = 0 : i64, scratch_operands = 0 : i64, tpu.core_type = #tpu.core_type<tc>, window_params = [{transform_indices = @transform_0, window_bounds = array<i64: 8, 16>}, {pipeline_mode = #tpu.pipeline_mode<synchronous>, transform_indices = @transform_1, window_bounds = array<i64: 16, 32>}, {pipeline_mode = #tpu.pipeline_mode<synchronous>, transform_indices = @transform_2, window_bounds = array<i64: 1, 32>}, {pipeline_mode = #tpu.pipeline_mode<synchronous>, transform_indices = @transform_3, window_bounds = array<i64: 32, 4>}, {pipeline_mode = #tpu.pipeline_mode<synchronous>, transform_indices = @transform_4, window_bounds = array<i64: 1, 4>}, {transform_indices = @transform_5, window_bounds = array<i64: 8, 4>}]} {
    %c0 = arith.constant 0 : index
    %c0_0 = arith.constant 0 : index
    %0 = vector.load %arg1[%c0, %c0_0] : memref<8x16xf32, #tpu.memory_space<vmem>>, vector<8x16xf32>
    %c0_1 = arith.constant 0 : index
    %c0_2 = arith.constant 0 : index
    %1 = vector.load %arg2[%c0_1, %c0_2] : memref<16x32xf32, #tpu.memory_space<vmem>>, vector<16x32xf32>
    %cst = arith.constant dense<0.000000e+00> : vector<8x32xf32>
    %2 = tpu.matmul %0, %1, %cst {dimension_numbers = #tpu.dot_dimension_numbers<[1], [0], [0], [1], [0, 0, 1, 1], [], []>} : vector<8x16xf32>, vector<16x32xf32>, vector<8x32xf32> -> vector<8x32xf32>
    %c0_3 = arith.constant 0 : index
    %c0_4 = arith.constant 0 : index
    %3 = vector.load %arg3[%c0_3, %c0_4] : memref<1x32xf32, #tpu.memory_space<vmem>>, vector<1x32xf32>
    %4 = vector.broadcast %3 : vector<1x32xf32> to vector<8x32xf32>
    %5 = arith.addf %2, %4 : vector<8x32xf32>
    %cst_5 = arith.constant 0.000000e+00 : f32
    %6 = vector.broadcast %cst_5 : f32 to vector<8x32xf32>
    %7 = arith.subf %6, %5 : vector<8x32xf32>
    %8 = math.exp %7 : vector<8x32xf32>
    %cst_6 = arith.constant 1.000000e+00 : f32
    %9 = vector.broadcast %cst_6 : f32 to vector<8x32xf32>
    %10 = arith.addf %9, %8 : vector<8x32xf32>
    %11 = tpu.reciprocal %10 {approx = true} : vector<8x32xf32> -> vector<8x32xf32>
    %c0_7 = arith.constant 0 : index
    %c0_8 = arith.constant 0 : index
    %12 = vector.load %arg4[%c0_7, %c0_8] : memref<32x4xf32, #tpu.memory_space<vmem>>, vector<32x4xf32>
    %cst_9 = arith.constant dense<0.000000e+00> : vector<8x4xf32>
    %13 = tpu.matmul %11, %12, %cst_9 {dimension_numbers = #tpu.dot_dimension_numbers<[1], [0], [0], [1], [0, 0, 1, 1], [], []>} : vector<8x32xf32>, vector<32x4xf32>, vector<8x4xf32> -> vector<8x4xf32>
    %c0_10 = arith.constant 0 : index
    %c0_11 = arith.constant 0 : index
    %14 = vector.load %arg5[%c0_10, %c0_11] : memref<1x4xf32, #tpu.memory_space<vmem>>, vector<1x4xf32>
    %15 = vector.broadcast %14 : vector<1x4xf32> to vector<8x4xf32>
    %16 = arith.addf %13, %15 : vector<8x4xf32>
    %c0_12 = arith.constant 0 : index
    %c0_13 = arith.constant 0 : index
    %17 = vector.load %arg6[%c0_12, %c0_13] : memref<8x4xf32, #tpu.memory_space<vmem>>, vector<8x4xf32>
    tpu.vector_store %arg6[%c0_12, %c0_13], %16 {strides = array<i32>} : memref<8x4xf32, #tpu.memory_space<vmem>>, vector<8x4xf32>,
    return
  }
  func.func @transform_0(%arg0: i32) -> (i32, i32) {
    %c0_i32 = arith.constant 0 : i32
    %c0_i32_0 = arith.constant 0 : i32
    return %arg0, %c0_i32 : i32, i32
  }
  func.func @transform_1(%arg0: i32) -> (i32, i32) {
    %c0_i32 = arith.constant 0 : i32
    %c0_i32_0 = arith.constant 0 : i32
    %c0_i32_1 = arith.constant 0 : i32
    return %c0_i32, %c0_i32_0 : i32, i32
  }
  func.func @transform_2(%arg0: i32) -> (i32, i32) {
    %c0_i32 = arith.constant 0 : i32
    %c0_i32_0 = arith.constant 0 : i32
    %c0_i32_1 = arith.constant 0 : i32
    return %c0_i32, %c0_i32_0 : i32, i32
  }
  func.func @transform_3(%arg0: i32) -> (i32, i32) {
    %c0_i32 = arith.constant 0 : i32
    %c0_i32_0 = arith.constant 0 : i32
    %c0_i32_1 = arith.constant 0 : i32
    return %c0_i32, %c0_i32_0 : i32, i32
  }
  func.func @transform_4(%arg0: i32) -> (i32, i32) {
    %c0_i32 = arith.constant 0 : i32
    %c0_i32_0 = arith.constant 0 : i32
    %c0_i32_1 = arith.constant 0 : i32
    return %c0_i32, %c0_i32_0 : i32, i32
  }
  func.func @transform_5(%arg0: i32) -> (i32, i32) {
    %c0_i32 = arith.constant 0 : i32
    %c0_i32_0 = arith.constant 0 : i32
    return %arg0, %c0_i32 : i32, i32
  }
}

</mosaic_0001>

<llo_original>
// kernel: nn_classifier_forward.1
$region0: #{nn_classifier_forward.1}
  #allocation0 [shape = 'u32[]', space=smem, size = 0x4, offset = 0x4, fixed_abs, tag = 'smem constant byte address 0x4 - core index']
  #allocation1 [shape = 'u32[72,128]{1,0:T(1,128)}', space=vmem, size = 0x9000, scoped, tag = 'internal scratch']
  %s0 = inlined_call_operand.vmem [shape: f32[8,16], index: 0, kind: input, shape index: {}]
  %s1 = inlined_call_operand.vmem [shape: f32[16,32], index: 1, kind: input, shape index: {}]
  %s2 = inlined_call_operand.vmem [shape: f32[1,32], index: 2, kind: input, shape index: {}]
  %s3 = inlined_call_operand.vmem [shape: f32[32,4], index: 3, kind: input, shape index: {}]
  %s4 = inlined_call_operand.vmem [shape: f32[1,4], index: 4, kind: input, shape index: {}]
  %s5 = inlined_call_operand.vmem [shape: f32[8,4], index: 5, kind: output, shape index: {}]
  %s6 = sld [smem:[#allocation0]]
  $region30: #{nn_classifier_forward.1} parent=0
    _
  %s8 = ssub.s32 1, %s6
  %s9 = scalar_select 0, %s8, %s6
  // Predicated region
  $region2: #{nn_classifier_forward.1} parent=0 // pred_check
    _
  $region3: #{nn_classifier_forward.1} parent=0 // pred_check_branch
    %11 = sbr.rel (0) target = $region5
  $region4: #{nn_classifier_forward.1} parent=0 // pred_region
    _
  $region5: #{nn_classifier_forward.1} parent=0 // pred_fallthru
    _
  // Predicated region
  $region6: #{nn_classifier_forward.1} parent=0 // pred_check
    _
  $region7: #{nn_classifier_forward.1} parent=0 // pred_check_branch
    %13 = sbr.rel (0) target = $region9
  $region8: #{nn_classifier_forward.1} parent=0 // pred_region
    _
  $region9: #{nn_classifier_forward.1} parent=0 // pred_fallthru
    _
  // Predicated region
  $region10: #{nn_classifier_forward.1} parent=0 // pred_check
    _
  $region11: #{nn_classifier_forward.1} parent=0 // pred_check_branch
    %15 = sbr.rel (0) target = $region13
  $region12: #{nn_classifier_forward.1} parent=0 // pred_region
    _
  $region13: #{nn_classifier_forward.1} parent=0 // pred_fallthru
    _
  // Predicated region
  $region14: #{nn_classifier_forward.1} parent=0 // pred_check
    _
  $region15: #{nn_classifier_forward.1} parent=0 // pred_check_branch
    %17 = sbr.rel (0) target = $region17
  $region16: #{nn_classifier_forward.1} parent=0 // pred_region
    _
  $region17: #{nn_classifier_forward.1} parent=0 // pred_fallthru
    _
  // Predicated region
  $region18: #{nn_classifier_forward.1} parent=0 // pred_check
    _
  $region19: #{nn_classifier_forward.1} parent=0 // pred_check_branch
    %19 = sbr.rel (0) target = $region21
  $region20: #{nn_classifier_forward.1} parent=0 // pred_region
    _
  $region21: #{nn_classifier_forward.1} parent=0 // pred_fallthru
    _
  %v20 = vld [vmem:[%s0] sm:$0xff]
  %v21 = vld [vmem:[%s1] sm:$0xff]
  %v22 = vld [vmem:[%s1 + $0x8] sm:$0xff]
  %v23 = vld [vmem:[%s2] sm:$0x1]
  %v25 = vperm.slane %v23, 0
  %vm27 = vcmask 130048
  %v29 = vsel %vm27, %v20, 0
  %31 = vmatpush.msra.mxu0 0.0
  %32 = vmatpush.msra.mxu0 0.0
  %33 = vmatpush.msra.mxu0 0.0
  %34 = vmatpush.msra.mxu0 0.0
  %35 = vmatpush.msra.mxu0 0.0
  %36 = vmatpush.msra.mxu0 0.0
  %37 = vmatpush.msra.mxu0 0.0
  %38 = vmatpush.msra.mxu0 0.0
  %39 = vmatpush.msra.mxu0 0.0
  %40 = vmatpush.msra.mxu0 0.0
  %41 = vmatpush.msra.mxu0 0.0
  %42 = vmatpush.msra.mxu0 0.0
  %43 = vmatpush.msra.mxu0 0.0
  %44 = vmatpush.msra.mxu0 0.0
  %45 = vmatpush.msra.mxu0 %v22
  %46 = vmatpush.msra.mxu0 %v21
  %47 = vmatmul.f32.gmra.mxu0 %v29
  %v48 = vpop.f32.mrf.mxu0
  %v49 = vadd.f32 %v25, %v48
  %50 = vdwg.mxu0
  %v51 = vsub.f32 0.0, %v49
  %v52 = vmul.f32 %v51, 1.442695
  %v53 = vpow.pop %v52
  %v54 = vadd.f32 %v53, 1.0
  %v55 = vrcp.pop %v54
  %v56 = vld [vmem:[%s3] sm:$0xff]
  %v57 = vld [vmem:[%s3 + $0x8] sm:$0xff]
  %v58 = vld [vmem:[%s3 + $0x10] sm:$0xff]
  %v59 = vld [vmem:[%s3 + $0x18] sm:$0xff]
  %v60 = vld [vmem:[%s4] sm:$0x1]
  %v62 = vperm.slane %v60, 0
  %vm64 = vcmask 261120
  %v66 = vsel %vm64, %v55, 0
  %68 = vmatpush.msra.mxu0 0.0
  %69 = vmatpush.msra.mxu0 0.0
  %70 = vmatpush.msra.mxu0 0.0
  %71 = vmatpush.msra.mxu0 0.0
  %72 = vmatpush.msra.mxu0 0.0
  %73 = vmatpush.msra.mxu0 0.0
  %74 = vmatpush.msra.mxu0 0.0
  %75 = vmatpush.msra.mxu0 0.0
  %76 = vmatpush.msra.mxu0 0.0
  %77 = vmatpush.msra.mxu0 0.0
  %78 = vmatpush.msra.mxu0 0.0
  %79 = vmatpush.msra.mxu0 0.0
  %80 = vmatpush.msra.mxu0 %v59
  %81 = vmatpush.msra.mxu0 %v58
  %82 = vmatpush.msra.mxu0 %v57
  %83 = vmatpush.msra.mxu0 %v56
  %84 = vmatmul.f32.gmra.mxu0 %v66
  %v85 = vpop.f32.mrf.mxu0
  %v86 = vadd.f32 %v62, %v85
  %87 = vdwg.mxu0
  %vm88 = vcmask 31744
  %89 = vst.msk [vmem:[%s5] sm:$0xff] %vm88, %v86
  // Predicated region
  $region22: #{nn_classifier_forward.1} parent=0 // pred_check
    _
  $region23: #{nn_classifier_forward.1} parent=0 // pred_check_branch
    %91 = sbr.rel (0) target = $region25
  $region24: #{nn_classifier_forward.1} parent=0 // pred_region
    _
  $region25: #{nn_classifier_forward.1} parent=0 // pred_fallthru
    _
  // Predicated region
  $region26: #{nn_classifier_forward.1} parent=0 // pred_check
    _
  $region27: #{nn_classifier_forward.1} parent=0 // pred_check_branch
    %93 = sbr.rel (0) target = $region29
  $region28: #{nn_classifier_forward.1} parent=0 // pred_region
    _
  $region29: #{nn_classifier_forward.1} parent=0 // pred_fallthru
    _

</llo_original>
